<compile_context>
chip_gen: v7x
topology: tpu7x:2x2x1
jax: 0.10.0
libtpu: 0.0.40
codegen_flags: <defaults>
</compile_context>

<pallas_src>
import functools

import jax
import jax.numpy as jnp
from jax.experimental import pallas as pl
from jax.experimental.pallas import tpu as pltpu


# -----------------------------------------------------------------------------
# Kernel: fused layer0 (+ReLU) -> layer1, adjacency & hidden stay in VMEM.
# -----------------------------------------------------------------------------
def fused_gcn_kernel(adj_t_ref, feat_ref, w0_ref, b0_ref, w1_ref, b1_ref, out_ref,
                     *, weight_first_0: bool, weight_first_1: bool):
    """adj_t_ref : (N_dst, N_src) bf16, A^T with A[s, d] = 1 iff edge s->d
       feat_ref  : (N, Fin)   f32
       w0_ref    : (Fin, H)   f32    b0_ref : (1, H)    f32
       w1_ref    : (H, Fpad)  f32    b1_ref : (1, Fpad) f32  (zero-padded lanes)
       out_ref   : (N, Fpad)  f32
    """
    # bf16 0/1 -> f32 once (exact); everything below computes in f32.
    adj_t = adj_t_ref[...].astype(jnp.float32)            # (N_dst, N_src)

    # ---- degree norms: computed ONCE, reused by both layers (XLU reductions) ----
    deg_in = jnp.sum(adj_t, axis=1, keepdims=True)         # in_degrees(dst)  (N, 1)
    deg_out = jnp.sum(adj_t, axis=0, keepdims=True)        # out_degrees(src) (1, N)
    norm_dst = jax.lax.rsqrt(jnp.maximum(deg_in, 1.0))     # clamp(min=1) ** -0.5
    norm_src = jax.lax.rsqrt(jnp.maximum(deg_out, 1.0))

    # Fold both norms into the adjacency once: A_hat = D_dst^-1/2 A^T D_src^-1/2.
    a_hat = adj_t * norm_dst * norm_src                    # (N_dst, N_src) f32

    def layer(x, w, b, weight_first, relu):
        # Branch order matches DGL GraphConv (project before/after aggregation);
        # with the folded norm both orders are mathematically identical.
        if weight_first:                                   # in_feats > out_feats
            x = jnp.dot(x, w, preferred_element_type=jnp.float32)
            y = jnp.dot(a_hat, x, preferred_element_type=jnp.float32)
        else:
            y = jnp.dot(a_hat, x, preferred_element_type=jnp.float32)
            y = jnp.dot(y, w, preferred_element_type=jnp.float32)
        y = y + b
        if relu:
            y = jnp.maximum(y, 0.0)
        return y

    # Layer 0 (ReLU) -> hidden stays in registers/VMEM, never written to HBM.
    h = layer(feat_ref[...], w0_ref[...], b0_ref[...], weight_first_0, relu=True)
    # Layer 1 (no activation), lane-dense padded output.
    out = layer(h, w1_ref[...], b1_ref[...], weight_first_1, relu=False)
    out_ref[...] = out.astype(out_ref.dtype)


# -----------------------------------------------------------------------------
# Wrapper
# -----------------------------------------------------------------------------
def gcn_forward(adj, features, params, *, lane=128):
    """GCN.forward: layer0 (relu) -> layer1 (no activation), fused in one kernel."""
    n = adj.shape[0]
    in_feats = features.shape[1]
    hid = params["w0"].shape[1]
    out_feats = params["w1"].shape[1]

    # Host-side prep (pure layout plumbing, no per-layer compute):
    #  * pre-transpose so the kernel's aggregation is a plain row-major matmul,
    #  * bf16 halves the dominant N x N HBM->VMEM DMA (0/1 values are exact).
    adj_t = jnp.transpose(adj).astype(jnp.bfloat16)

    # Lane-dense final output: pad Fout up to a multiple of 128 lanes.
    fo_pad = max(lane, ((out_feats + lane - 1) // lane) * lane)
    w0 = params["w0"].astype(jnp.float32)
    b0 = params["b0"].reshape(1, hid).astype(jnp.float32)
    w1 = jnp.zeros((hid, fo_pad), jnp.float32).at[:, :out_feats].set(params["w1"])
    b1 = jnp.zeros((1, fo_pad), jnp.float32).at[:, :out_feats].set(params["b1"])

    # DGL branch selection uses the true (unpadded) feature sizes.
    weight_first_0 = in_feats > hid
    weight_first_1 = hid > out_feats

    kernel = functools.partial(fused_gcn_kernel,
                               weight_first_0=weight_first_0,
                               weight_first_1=weight_first_1)

    # Advisory cost estimate for XLA scheduling.
    flops = int(2 * n * n * (in_feats + fo_pad)            # two aggregations
                + 2 * n * (in_feats * hid + hid * fo_pad)  # two projections
                + 3 * n * n)                               # norm fold + degree sums
    bytes_accessed = int(adj_t.size * adj_t.dtype.itemsize
                         + (features.size + w0.size + b0.size + w1.size + b1.size) * 4
                         + n * fo_pad * 4)
    cost = pl.CostEstimate(flops=flops, transcendentals=2 * n,
                           bytes_accessed=bytes_accessed)

    out_padded = pl.pallas_call(
        kernel,
        out_shape=jax.ShapeDtypeStruct((n, fo_pad), jnp.float32),
        in_specs=[
            pl.BlockSpec((n, n), lambda: (0, 0)),          # A^T (bf16)
            pl.BlockSpec((n, in_feats), lambda: (0, 0)),   # features
            pl.BlockSpec((in_feats, hid), lambda: (0, 0)),
            pl.BlockSpec((1, hid), lambda: (0, 0)),
            pl.BlockSpec((hid, fo_pad), lambda: (0, 0)),
            pl.BlockSpec((1, fo_pad), lambda: (0, 0)),
        ],
        out_specs=pl.BlockSpec((n, fo_pad), lambda: (0, 0)),
        compiler_params=pltpu.CompilerParams(vmem_limit_bytes=32 * 1024 * 1024),
        cost_estimate=cost,
    )(adj_t, features, w0, b0, w1, b1)

    return out_padded[:, :out_feats]


# -----------------------------------------------------------------------------
# Pure-JAX reference (mirrors DGL GraphConv norm='both' exactly) for checking.
# -----------------------------------------------------------------------------
def gcn_reference(adj, feat, params):
    def layer(h, w, b, relu):
        deg_out = jnp.maximum(jnp.sum(adj, axis=1), 1.0)   # out_degrees(src)
        deg_in = jnp.maximum(jnp.sum(adj, axis=0), 1.0)    # in_degrees(dst)
        h = h * (deg_out ** -0.5)[:, None]
        if h.shape[1] > w.shape[1]:                        # in_feats > out_feats
            h = h @ w
            rst = adj.T @ h
        else:
            rst = adj.T @ h
            rst = rst @ w
        rst = rst * (deg_in ** -0.5)[:, None] + b
        return jnp.maximum(rst, 0.0) if relu else rst

    h = layer(feat, params["w0"], params["b0"], True)
    return layer(h, params["w1"], params["b1"], False)


def xavier_uniform(key, fan_in, fan_out):
    bound = (6.0 / (fan_in + fan_out)) ** 0.5
    return jax.random.uniform(key, (fan_in, fan_out), jnp.float32, -bound, bound)


if __name__ == "__main__":
    # Small deterministic problem: N=64 nodes, in=16, hid=32, out=8.
    N, IN_SIZE, HID_SIZE, OUT_SIZE = 64, 16, 32, 8

    key = jax.random.PRNGKey(0)
    k_adj, k_feat, k_w0, k_w1 = jax.random.split(key, 4)

    # Dense adjacency with self-loops so every node has in-degree >= 1
    # (GCNLayer raises on zero-in-degree nodes; self-loops satisfy that check).
    adj = (jax.random.uniform(k_adj, (N, N)) < 0.25).astype(jnp.float32)
    adj = jnp.maximum(adj, jnp.eye(N, dtype=jnp.float32))

    features = jax.random.normal(k_feat, (N, IN_SIZE), jnp.float32)

    params = {
        "w0": xavier_uniform(k_w0, IN_SIZE, HID_SIZE),   # nn.init.xavier_uniform_
        "b0": jnp.zeros((HID_SIZE,), jnp.float32),       # nn.init.zeros_
        "w1": xavier_uniform(k_w1, HID_SIZE, OUT_SIZE),
        "b1": jnp.zeros((OUT_SIZE,), jnp.float32),
    }

    out = gcn_forward(adj, features, params)
    jax.block_until_ready(out)
    assert out.shape == (N, OUT_SIZE)

    ref = gcn_reference(adj, features, params)
    assert jnp.allclose(out, ref, rtol=1e-4, atol=1e-4), "mismatch vs pure-JAX reference"

    print("KERNEL_OK")
</pallas_src>

<mosaic_0001>
module attributes {stable_mosaic.version = 11 : i64} {
  func.func @fused_gcn_kernel(%arg0: memref<64x64xbf16, #tpu.memory_space<vmem>>, %arg1: memref<64x16xf32, #tpu.memory_space<vmem>>, %arg2: memref<16x32xf32, #tpu.memory_space<vmem>>, %arg3: memref<1x32xf32, #tpu.memory_space<vmem>>, %arg4: memref<32x128xf32, #tpu.memory_space<vmem>>, %arg5: memref<1x128xf32, #tpu.memory_space<vmem>>, %arg6: memref<64x128xf32, #tpu.memory_space<vmem>>) attributes {dimension_semantics = [], scalar_prefetch = 0 : i64, scratch_operands = 0 : i64, tpu.core_type = #tpu.core_type<tc>} {
    %c0 = arith.constant 0 : index
    %c0_0 = arith.constant 0 : index
    %0 = vector.load %arg0[%c0, %c0_0] : memref<64x64xbf16, #tpu.memory_space<vmem>>, vector<64x64xbf16>
    %1 = arith.extf %0 : vector<64x64xbf16> to vector<64x64xf32>
    %cst = arith.constant dense<0.000000e+00> : vector<64xf32>
    %2 = vector.multi_reduction <add>, %1, %cst [1] : vector<64x64xf32> to vector<64xf32>
    %3 = vector.shape_cast %2 : vector<64xf32> to vector<64x1xf32>
    %cst_1 = arith.constant dense<0.000000e+00> : vector<64xf32>
    %4 = vector.multi_reduction <add>, %1, %cst_1 [0] : vector<64x64xf32> to vector<64xf32>
    %5 = vector.shape_cast %4 : vector<64xf32> to vector<1x64xf32>
    %cst_2 = arith.constant 1.000000e+00 : f32
    %6 = vector.broadcast %cst_2 : f32 to vector<64x1xf32>
    %7 = arith.maximumf %3, %6 : vector<64x1xf32>
    %8 = math.rsqrt %7 : vector<64x1xf32>
    %cst_3 = arith.constant 1.000000e+00 : f32
    %9 = vector.broadcast %cst_3 : f32 to vector<1x64xf32>
    %10 = arith.maximumf %5, %9 : vector<1x64xf32>
    %11 = math.rsqrt %10 : vector<1x64xf32>
    %12 = vector.broadcast %8 : vector<64x1xf32> to vector<64x64xf32>
    %13 = arith.mulf %1, %12 : vector<64x64xf32>
    %14 = vector.broadcast %11 : vector<1x64xf32> to vector<64x64xf32>
    %15 = arith.mulf %13, %14 : vector<64x64xf32>
    %c0_4 = arith.constant 0 : index
    %c0_5 = arith.constant 0 : index
    %16 = vector.load %arg1[%c0_4, %c0_5] : memref<64x16xf32, #tpu.memory_space<vmem>>, vector<64x16xf32>
    %c0_6 = arith.constant 0 : index
    %c0_7 = arith.constant 0 : index
    %17 = vector.load %arg2[%c0_6, %c0_7] : memref<16x32xf32, #tpu.memory_space<vmem>>, vector<16x32xf32>
    %c0_8 = arith.constant 0 : index
    %c0_9 = arith.constant 0 : index
    %18 = vector.load %arg3[%c0_8, %c0_9] : memref<1x32xf32, #tpu.memory_space<vmem>>, vector<1x32xf32>
    %cst_10 = arith.constant dense<0.000000e+00> : vector<64x16xf32>
    %19 = tpu.matmul %15, %16, %cst_10 {dimension_numbers = #tpu.dot_dimension_numbers<[1], [0], [0], [1], [0, 0, 1, 1], [], []>} : vector<64x64xf32>, vector<64x16xf32>, vector<64x16xf32> -> vector<64x16xf32>
    %cst_11 = arith.constant dense<0.000000e+00> : vector<64x32xf32>
    %20 = tpu.matmul %19, %17, %cst_11 {dimension_numbers = #tpu.dot_dimension_numbers<[1], [0], [0], [1], [0, 0, 1, 1], [], []>} : vector<64x16xf32>, vector<16x32xf32>, vector<64x32xf32> -> vector<64x32xf32>
    %21 = vector.broadcast %18 : vector<1x32xf32> to vector<64x32xf32>
    %22 = arith.addf %20, %21 : vector<64x32xf32>
    %cst_12 = arith.constant 0.000000e+00 : f32
    %23 = vector.broadcast %cst_12 : f32 to vector<64x32xf32>
    %24 = arith.maximumf %22, %23 : vector<64x32xf32>
    %c0_13 = arith.constant 0 : index
    %c0_14 = arith.constant 0 : index
    %25 = vector.load %arg4[%c0_13, %c0_14] : memref<32x128xf32, #tpu.memory_space<vmem>>, vector<32x128xf32>
    %c0_15 = arith.constant 0 : index
    %c0_16 = arith.constant 0 : index
    %26 = vector.load %arg5[%c0_15, %c0_16] : memref<1x128xf32, #tpu.memory_space<vmem>>, vector<1x128xf32>
    %cst_17 = arith.constant dense<0.000000e+00> : vector<64x128xf32>
    %27 = tpu.matmul %24, %25, %cst_17 {dimension_numbers = #tpu.dot_dimension_numbers<[1], [0], [0], [1], [0, 0, 1, 1], [], []>} : vector<64x32xf32>, vector<32x128xf32>, vector<64x128xf32> -> vector<64x128xf32>
    %cst_18 = arith.constant dense<0.000000e+00> : vector<64x128xf32>
    %28 = tpu.matmul %15, %27, %cst_18 {dimension_numbers = #tpu.dot_dimension_numbers<[1], [0], [0], [1], [0, 0, 1, 1], [], []>} : vector<64x64xf32>, vector<64x128xf32>, vector<64x128xf32> -> vector<64x128xf32>
    %29 = vector.broadcast %26 : vector<1x128xf32> to vector<64x128xf32>
    %30 = arith.addf %28, %29 : vector<64x128xf32>
    %c0_19 = arith.constant 0 : index
    %c0_20 = arith.constant 0 : index
    %31 = vector.load %arg6[%c0_19, %c0_20] : memref<64x128xf32, #tpu.memory_space<vmem>>, vector<64x128xf32>
    tpu.vector_store %arg6[%c0_19, %c0_20], %30 {strides = array<i32>} : memref<64x128xf32, #tpu.memory_space<vmem>>, vector<64x128xf32>,
    return
  }
}

</mosaic_0001>

<llo_original>
// kernel: tpu_custom_call.1
$region0: #{tpu_custom_call.1}
  #allocation0 [shape = 'u32[]', space=smem, size = 0x4, offset = 0x4, fixed_abs, tag = 'smem constant byte address 0x4 - core index']
  #allocation1 [shape = 'u32[144,128]{1,0:T(1,128)}', space=vmem, size = 0x12000, scoped, tag = 'internal scratch']
  %s0 = inlined_call_operand.vmem [shape: bf16[64,64], index: 0, kind: input, shape index: {}]
  %s1 = inlined_call_operand.vmem [shape: f32[64,16], index: 1, kind: input, shape index: {}]
  %s2 = inlined_call_operand.vmem [shape: f32[16,32], index: 2, kind: input, shape index: {}]
  %s3 = inlined_call_operand.vmem [shape: f32[1,32], index: 3, kind: input, shape index: {}]
  %s4 = inlined_call_operand.vmem [shape: f32[32,128], index: 4, kind: input, shape index: {}]
  %s5 = inlined_call_operand.vmem [shape: f32[1,128], index: 5, kind: input, shape index: {}]
  %s6 = inlined_call_operand.hbm [shape: f32[64,128], index: 6, kind: output, shape index: {}]
  %s7 = sld [smem:[#allocation0]]
  $region34: #{tpu_custom_call.1} parent=0
    _
  %s9 = ssub.s32 1, %s7
  %s10 = scalar_select 0, %s9, %s7
  $region1: #{tpu_custom_call.1} parent=0
    #allocation2 [shape = 'u8[32768]{0}', space=vmem, size = 0x8000, scoped, tag = 'output window, operand 0, single buffered']
    #allocation3 [shape = 's32[1]{0}', space=sflag, size = 0x4, scoped, tag = 'scoped memory for tpu_custom_call.1']
    %11 = vsyncpa [#allocation3], 0
    // Predicated region
    $region2: #{tpu_custom_call.1} parent=1 // pred_check
      _
    $region3: #{tpu_custom_call.1} parent=1 // pred_check_branch
      %13 = sbr.rel (0) target = $region5
    $region4: #{tpu_custom_call.1} parent=1 // pred_region
      _
    $region5: #{tpu_custom_call.1} parent=1 // pred_fallthru
      _
    // Predicated region
    $region6: #{tpu_custom_call.1} parent=1 // pred_check
      _
    $region7: #{tpu_custom_call.1} parent=1 // pred_check_branch
      %15 = sbr.rel (0) target = $region9
    $region8: #{tpu_custom_call.1} parent=1 // pred_region
      _
    $region9: #{tpu_custom_call.1} parent=1 // pred_fallthru
      _
    // Predicated region
    $region10: #{tpu_custom_call.1} parent=1 // pred_check
      _
    $region11: #{tpu_custom_call.1} parent=1 // pred_check_branch
      %17 = sbr.rel (0) target = $region13
    $region12: #{tpu_custom_call.1} parent=1 // pred_region
      _
    $region13: #{tpu_custom_call.1} parent=1 // pred_fallthru
      _
    // Predicated region
    $region14: #{tpu_custom_call.1} parent=1 // pred_check
      _
    $region15: #{tpu_custom_call.1} parent=1 // pred_check_branch
      %19 = sbr.rel (0) target = $region17
    $region16: #{tpu_custom_call.1} parent=1 // pred_region
      _
    $region17: #{tpu_custom_call.1} parent=1 // pred_fallthru
      _
    // Predicated region
    $region18: #{tpu_custom_call.1} parent=1 // pred_check
      _
    $region19: #{tpu_custom_call.1} parent=1 // pred_check_branch
      %21 = sbr.rel (0) target = $region21
    $region20: #{tpu_custom_call.1} parent=1 // pred_region
      _
    $region21: #{tpu_custom_call.1} parent=1 // pred_fallthru
      _
    // Predicated region
    $region22: #{tpu_custom_call.1} parent=1 // pred_check
      _
    $region23: #{tpu_custom_call.1} parent=1 // pred_check_branch
      %23 = sbr.rel (0) target = $region25
    $region24: #{tpu_custom_call.1} parent=1 // pred_region
      _
    $region25: #{tpu_custom_call.1} parent=1 // pred_fallthru
      _
    %v24 = vld [vmem:[%s0] sm:$0xf]
    %v25 = vld [vmem:[%s0 + $0x4] sm:$0xf]
    %v26 = vld [vmem:[%s0 + $0x8] sm:$0xf]
    %v27 = vld [vmem:[%s0 + $0xc] sm:$0xf]
    %v28 = vld [vmem:[%s0 + $0x10] sm:$0xf]
    %v29 = vld [vmem:[%s0 + $0x14] sm:$0xf]
    %v30 = vld [vmem:[%s0 + $0x18] sm:$0xf]
    %v31 = vld [vmem:[%s0 + $0x1c] sm:$0xf]
    %v32 = vunpack.c.l.bf16 %v24
    %v33 = vunpack.c.l.bf16 %v25
    %v34 = vunpack.c.l.bf16 %v26
    %v35 = vunpack.c.l.bf16 %v27
    %v36 = vunpack.c.l.bf16 %v28
    %v37 = vunpack.c.l.bf16 %v29
    %v38 = vunpack.c.l.bf16 %v30
    %v39 = vunpack.c.l.bf16 %v31
    %vm40 = vcmask 523264
    %v41 = vsel %vm40, %v32, 0.0
    %42 = vadd.xlane.f32.xlu0 %v41
    %v43 = vpop.xlane.xlu0 %42
    %v44 = vsel %vm40, %v33, 0.0
    %45 = vadd.xlane.f32.xlu0 %v44
    %v46 = vpop.xlane.xlu0 %45
    %v47 = vsel %vm40, %v34, 0.0
    %48 = vadd.xlane.f32.xlu0 %v47
    %v49 = vpop.xlane.xlu0 %48
    %v50 = vsel %vm40, %v35, 0.0
    %51 = vadd.xlane.f32.xlu0 %v50
    %v52 = vpop.xlane.xlu0 %51
    %v53 = vsel %vm40, %v36, 0.0
    %54 = vadd.xlane.f32.xlu0 %v53
    %v55 = vpop.xlane.xlu0 %54
    %v56 = vsel %vm40, %v37, 0.0
    %57 = vadd.xlane.f32.xlu0 %v56
    %v58 = vpop.xlane.xlu0 %57
    %v59 = vsel %vm40, %v38, 0.0
    %60 = vadd.xlane.f32.xlu0 %v59
    %v61 = vpop.xlane.xlu0 %60
    %v62 = vsel %vm40, %v39, 0.0
    %63 = vadd.xlane.f32.xlu0 %v62
    %v64 = vpop.xlane.xlu0 %63
    %v65 = vadd.f32 %v41, %v44
    %v66 = vadd.f32 %v65, %v47
    %v67 = vadd.f32 %v66, %v50
    %v68 = vadd.f32 %v67, %v53
    %v69 = vadd.f32 %v68, %v56
    %v70 = vadd.f32 %v69, %v59
    %v71 = vadd.f32 %v70, %v62
    %v72 = vrot.slane %v71, 4
    %v73 = vadd.f32 %v71, %v72
    %v74 = vrot.slane %v73, 2
    %v75 = vadd.f32 %v73, %v74
    %v76 = vrot.slane %v75, 1
    %v77 = vadd.f32 %v75, %v76
    %v78 = vmax.f32 %v43, 1.0
    %v79 = vmax.f32 %v46, 1.0
    %v80 = vmax.f32 %v49, 1.0
    %v81 = vmax.f32 %v52, 1.0
    %v82 = vmax.f32 %v55, 1.0
    %v83 = vmax.f32 %v58, 1.0
    %v84 = vmax.f32 %v61, 1.0
    %v85 = vmax.f32 %v64, 1.0
    %v86 = vrsqrt.pop %v78
    %v87 = vrsqrt.pop %v79
    %v88 = vrsqrt.pop %v80
    %v89 = vrsqrt.pop %v81
    %v90 = vrsqrt.pop %v82
    %v91 = vrsqrt.pop %v83
    %v92 = vrsqrt.pop %v84
    %v93 = vrsqrt.pop %v85
    %v94 = vmax.f32 %v77, 1.0
    %v95 = vrsqrt.pop %v94
    %v96 = vmul.f32 %v32, %v86
    %v97 = vmul.f32 %v33, %v87
    %v98 = vmul.f32 %v34, %v88
    %v99 = vmul.f32 %v35, %v89
    %v100 = vmul.f32 %v36, %v90
    %v101 = vmul.f32 %v37, %v91
    %v102 = vmul.f32 %v38, %v92
    %v103 = vmul.f32 %v39, %v93
    %v104 = vmul.f32 %v96, %v95
    %v105 = vmul.f32 %v97, %v95
    %v106 = vmul.f32 %v98, %v95
    %v107 = vmul.f32 %v99, %v95
    %v108 = vmul.f32 %v100, %v95
    %v109 = vmul.f32 %v101, %v95
    %v110 = vmul.f32 %v102, %v95
    %v111 = vmul.f32 %v103, %v95
    %v112 = vld [vmem:[%s1] sm:$0xff]
    %v113 = vld [vmem:[%s1 + $0x8] sm:$0xff]
    %v114 = vld [vmem:[%s1 + $0x10] sm:$0xff]
    %v115 = vld [vmem:[%s1 + $0x18] sm:$0xff]
    %v116 = vld [vmem:[%s1 + $0x20] sm:$0xff]
    %v117 = vld [vmem:[%s1 + $0x28] sm:$0xff]
    %v118 = vld [vmem:[%s1 + $0x30] sm:$0xff]
    %v119 = vld [vmem:[%s1 + $0x38] sm:$0xff]
    %v120 = vld [vmem:[%s2] sm:$0xff]
    %v121 = vld [vmem:[%s2 + $0x8] sm:$0xff]
    %v122 = vld [vmem:[%s3] sm:$0x1]
    %v124 = vsel %vm40, %v104, 0
    %v127 = vsel %vm40, %v105, 0
    %v130 = vsel %vm40, %v106, 0
    %v133 = vsel %vm40, %v107, 0
    %v136 = vsel %vm40, %v108, 0
    %v139 = vsel %vm40, %v109, 0
    %v142 = vsel %vm40, %v110, 0
    %v145 = vsel %vm40, %v111, 0
    %147 = vmatprep.subr.mxu0 0.0
    %148 = vmatpush1.msra.mxu0 %v112
    %149 = vmatprep.subr.mxu0 0.0
    %150 = vmatpush1.msra.mxu0 %v113
    %151 = vmatprep.subr.mxu0 0.0
    %152 = vmatpush1.msra.mxu0 %v114
    %153 = vmatprep.subr.mxu0 0.0
    %154 = vmatpush1.msra.mxu0 %v115
    %155 = vmatprep.subr.mxu0 0.0
    %156 = vmatpush1.msra.mxu0 %v116
    %157 = vmatprep.subr.mxu0 0.0
    %158 = vmatpush1.msra.mxu0 %v117
    %159 = vmatprep.subr.mxu0 0.0
    %160 = vmatpush1.msra.mxu0 %v118
    %161 = vmatprep.subr.mxu0 0.0
    %162 = vmatpush1.msra.mxu0 %v119
    %163 = vmatprep.subr.mxu0 0.0
    %164 = vmatpush1.msra.mxu0 0.0
    %165 = vmatprep.subr.mxu0 0.0
    %166 = vmatpush1.msra.mxu0 0.0
    %167 = vmatprep.subr.mxu0 0.0
    %168 = vmatpush1.msra.mxu0 0.0
    %169 = vmatprep.subr.mxu0 0.0
    %170 = vmatpush1.msra.mxu0 0.0
    %171 = vmatprep.subr.mxu0 0.0
    %172 = vmatpush1.msra.mxu0 0.0
    %173 = vmatprep.subr.mxu0 0.0
    %174 = vmatpush1.msra.mxu0 0.0
    %175 = vmatprep.subr.mxu0 0.0
    %176 = vmatpush1.msra.mxu0 0.0
    %177 = vmatprep.subr.mxu0 0.0
    %178 = vmatpush1.msra.mxu0 0.0
    %179 = vmatprep.subr.mxu0 0.0
    %180 = vmatpush1.msra.mxu0 0.0
    %181 = vmatprep.subr.mxu0 0.0
    %182 = vmatpush1.msra.mxu0 0.0
    %183 = vmatprep.subr.mxu0 0.0
    %184 = vmatpush1.msra.mxu0 0.0
    %185 = vmatprep.subr.mxu0 0.0
    %186 = vmatpush1.msra.mxu0 0.0
    %187 = vmatprep.subr.mxu0 0.0
    %188 = vmatpush1.msra.mxu0 0.0
    %189 = vmatprep.subr.mxu0 0.0
    %190 = vmatpush1.msra.mxu0 0.0
    %191 = vmatprep.subr.mxu0 0.0
    %192 = vmatpush1.msra.mxu0 0.0
    %193 = vmatprep.subr.mxu0 0.0
    %194 = vmatpush1.msra.mxu0 0.0
    %195 = vmatprep.subr.mxu0 0.0
    %196 = vmatpush1.msra.mxu0 0.0
    %197 = vmatprep.subr.mxu0 0.0
    %198 = vmatpush1.msra.mxu0 0.0
    %199 = vmatprep.subr.mxu0 0.0
    %200 = vmatpush1.msra.mxu0 0.0
    %201 = vmatprep.subr.mxu0 0.0
    %202 = vmatpush1.msra.mxu0 0.0
    %203 = vmatprep.subr.mxu0 0.0
    %204 = vmatpush1.msra.mxu0 0.0
    %205 = vmatprep.subr.mxu0 0.0
    %206 = vmatpush1.msra.mxu0 0.0
    %207 = vmatprep.subr.mxu0 0.0
    %208 = vmatpush1.msra.mxu0 0.0
    %209 = vmatprep.subr.mxu0 0.0
    %210 = vmatpush1.msra.mxu0 0.0
    %211 = vmatprep.mubr.f32.mxu0 0.0
    %212 = vmatmul.mubr.f32.gmra.mrb[0].mxu0 %v124
    %v213 = vpop.f32.mrb[0].mxu0
    %v214 = vadd.f32 0.0, %v213
    %v215 = vpop.f32.mrb[0].mxu0
    %216 = vmatprep.mubr.f32.mxu0 0.0
    %217 = vmatmul.mubr.f32.gmra.mrb[0].mxu0 %v127
    %v218 = vpop.f32.mrb[0].mxu0
    %v219 = vadd.f32 0.0, %v218
    %v220 = vpop.f32.mrb[0].mxu0
    %221 = vmatprep.mubr.f32.mxu0 0.0
    %222 = vmatmul.mubr.f32.gmra.mrb[0].mxu0 %v130
    %v223 = vpop.f32.mrb[0].mxu0
    %v224 = vadd.f32 0.0, %v223
    %v225 = vpop.f32.mrb[0].mxu0
    %226 = vmatprep.mubr.f32.mxu0 0.0
    %227 = vmatmul.mubr.f32.gmra.mrb[0].mxu0 %v133
    %v228 = vpop.f32.mrb[0].mxu0
    %v229 = vadd.f32 0.0, %v228
    %v230 = vpop.f32.mrb[0].mxu0
    %231 = vmatprep.mubr.f32.mxu0 0.0
    %232 = vmatmul.mubr.f32.gmra.mrb[0].mxu0 %v136
    %v233 = vpop.f32.mrb[0].mxu0
    %v234 = vadd.f32 0.0, %v233
    %v235 = vpop.f32.mrb[0].mxu0
    %236 = vmatprep.mubr.f32.mxu0 0.0
    %237 = vmatmul.mubr.f32.gmra.mrb[0].mxu0 %v139
    %v238 = vpop.f32.mrb[0].mxu0
    %v239 = vadd.f32 0.0, %v238
    %v240 = vpop.f32.mrb[0].mxu0
    %241 = vmatprep.mubr.f32.mxu0 0.0
    %242 = vmatmul.mubr.f32.gmra.mrb[0].mxu0 %v142
    %v243 = vpop.f32.mrb[0].mxu0
    %v244 = vadd.f32 0.0, %v243
    %v245 = vpop.f32.mrb[0].mxu0
    %246 = vmatprep.mubr.f32.mxu0 0.0
    %247 = vmatmul.mubr.f32.gmra.mrb[0].mxu0 %v145
    %v248 = vpop.f32.mrb[0].mxu0
    %v249 = vadd.f32 0.0, %v248
    %v250 = vpop.f32.mrb[0].mxu0
    %251 = vdwg.mxu0
    %v253 = vlaneseq
    %v254 = vshrl.u32 %v253, 7
    %v255 = vsub.s32 0, %v254
    %v256 = vrot.slane %v122, %v255
    %vm258 = vcmask 130048
    %v260 = vsel %vm258, %v214, 0
    %v263 = vsel %vm258, %v219, 0
    %v266 = vsel %vm258, %v224, 0
    %v269 = vsel %vm258, %v229, 0
    %v272 = vsel %vm258, %v234, 0
    %v275 = vsel %vm258, %v239, 0
    %v278 = vsel %vm258, %v244, 0
    %v281 = vsel %vm258, %v249, 0
    %283 = vmatprep.subr.mxu0 0.0
    %284 = vmatpush1.msra.mxu0 %v120
    %285 = vmatprep.subr.mxu0 0.0
    %286 = vmatpush1.msra.mxu0 %v121
    %287 = vmatprep.subr.mxu0 0.0
    %288 = vmatpush1.msra.mxu0 0.0
    %289 = vmatprep.subr.mxu0 0.0
    %290 = vmatpush1.msra.mxu0 0.0
    %291 = vmatprep.subr.mxu0 0.0
    %292 = vmatpush1.msra.mxu0 0.0
    %293 = vmatprep.subr.mxu0 0.0
    %294 = vmatpush1.msra.mxu0 0.0
    %295 = vmatprep.subr.mxu0 0.0
    %296 = vmatpush1.msra.mxu0 0.0
    %297 = vmatprep.subr.mxu0 0.0
    %298 = vmatpush1.msra.mxu0 0.0
    %299 = vmatprep.subr.mxu0 0.0
    %300 = vmatpush1.msra.mxu0 0.0
    %301 = vmatprep.subr.mxu0 0.0
    %302 = vmatpush1.msra.mxu0 0.0
    %303 = vmatprep.subr.mxu0 0.0
    %304 = vmatpush1.msra.mxu0 0.0
    %305 = vmatprep.subr.mxu0 0.0
    %306 = vmatpush1.msra.mxu0 0.0
    %307 = vmatprep.subr.mxu0 0.0
    %308 = vmatpush1.msra.mxu0 0.0
    %309 = vmatprep.subr.mxu0 0.0
    %310 = vmatpush1.msra.mxu0 0.0
    %311 = vmatprep.subr.mxu0 0.0
    %312 = vmatpush1.msra.mxu0 0.0
    %313 = vmatprep.subr.mxu0 0.0
    %314 = vmatpush1.msra.mxu0 0.0
    %315 = vmatprep.subr.mxu0 0.0
    %316 = vmatpush1.msra.mxu0 0.0
    %317 = vmatprep.subr.mxu0 0.0
    %318 = vmatpush1.msra.mxu0 0.0
    %319 = vmatprep.subr.mxu0 0.0
    %320 = vmatpush1.msra.mxu0 0.0
    %321 = vmatprep.subr.mxu0 0.0
    %322 = vmatpush1.msra.mxu0 0.0
    %323 = vmatprep.subr.mxu0 0.0
    %324 = vmatpush1.msra.mxu0 0.0
    %325 = vmatprep.subr.mxu0 0.0
    %326 = vmatpush1.msra.mxu0 0.0
    %327 = vmatprep.subr.mxu0 0.0
    %328 = vmatpush1.msra.mxu0 0.0
    %329 = vmatprep.subr.mxu0 0.0
    %330 = vmatpush1.msra.mxu0 0.0
    %331 = vmatprep.subr.mxu0 0.0
    %332 = vmatpush1.msra.mxu0 0.0
    %333 = vmatprep.subr.mxu0 0.0
    %334 = vmatpush1.msra.mxu0 0.0
    %335 = vmatprep.subr.mxu0 0.0
    %336 = vmatpush1.msra.mxu0 0.0
    %337 = vmatprep.subr.mxu0 0.0
    %338 = vmatpush1.msra.mxu0 0.0
    %339 = vmatprep.subr.mxu0 0.0
    %340 = vmatpush1.msra.mxu0 0.0
    %341 = vmatprep.subr.mxu0 0.0
    %342 = vmatpush1.msra.mxu0 0.0
    %343 = vmatprep.subr.mxu0 0.0
    %344 = vmatpush1.msra.mxu0 0.0
    %345 = vmatprep.subr.mxu0 0.0
    %346 = vmatpush1.msra.mxu0 0.0
    %347 = vmatprep.mubr.f32.mxu0 0.0
    %348 = vmatmul.mubr.f32.gmra.mrb[0].mxu0 %v260
    %v349 = vpop.f32.mrb[0].mxu0
    %v350 = vadd.f32 %v256, %v349
    %v351 = vpop.f32.mrb[0].mxu0
    %352 = vmatprep.mubr.f32.mxu0 0.0
    %353 = vmatmul.mubr.f32.gmra.mrb[0].mxu0 %v263
    %v354 = vpop.f32.mrb[0].mxu0
    %v355 = vadd.f32 %v256, %v354
    %v356 = vpop.f32.mrb[0].mxu0
    %357 = vmatprep.mubr.f32.mxu0 0.0
    %358 = vmatmul.mubr.f32.gmra.mrb[0].mxu0 %v266
    %v359 = vpop.f32.mrb[0].mxu0
    %v360 = vadd.f32 %v256, %v359
    %v361 = vpop.f32.mrb[0].mxu0
    %362 = vmatprep.mubr.f32.mxu0 0.0
    %363 = vmatmul.mubr.f32.gmra.mrb[0].mxu0 %v269
    %v364 = vpop.f32.mrb[0].mxu0
    %v365 = vadd.f32 %v256, %v364
    %v366 = vpop.f32.mrb[0].mxu0
    %367 = vmatprep.mubr.f32.mxu0 0.0
    %368 = vmatmul.mubr.f32.gmra.mrb[0].mxu0 %v272
    %v369 = vpop.f32.mrb[0].mxu0
    %v370 = vadd.f32 %v256, %v369
    %v371 = vpop.f32.mrb[0].mxu0
    %372 = vmatprep.mubr.f32.mxu0 0.0
    %373 = vmatmul.mubr.f32.gmra.mrb[0].mxu0 %v275
    %v374 = vpop.f32.mrb[0].mxu0
    %v375 = vadd.f32 %v256, %v374
    %v376 = vpop.f32.mrb[0].mxu0
    %377 = vmatprep.mubr.f32.mxu0 0.0
    %378 = vmatmul.mubr.f32.gmra.mrb[0].mxu0 %v278
    %v379 = vpop.f32.mrb[0].mxu0
    %v380 = vadd.f32 %v256, %v379
    %v381 = vpop.f32.mrb[0].mxu0
    %382 = vmatprep.mubr.f32.mxu0 0.0
    %383 = vmatmul.mubr.f32.gmra.mrb[0].mxu0 %v281
    %v384 = vpop.f32.mrb[0].mxu0
    %v385 = vadd.f32 %v256, %v384
    %v386 = vpop.f32.mrb[0].mxu0
    %387 = vdwg.mxu0
    %v388 = vmax.f32 %v350, 0.0
    %v389 = vmax.f32 %v355, 0.0
    %v390 = vmax.f32 %v360, 0.0
    %v391 = vmax.f32 %v365, 0.0
    %v392 = vmax.f32 %v370, 0.0
    %v393 = vmax.f32 %v375, 0.0
    %v394 = vmax.f32 %v380, 0.0
    %v395 = vmax.f32 %v385, 0.0
    %v396 = vld [vmem:[%s4] sm:$0xff]
    %v397 = vld [vmem:[%s4 + $0x8] sm:$0xff]
    %v398 = vld [vmem:[%s4 + $0x10] sm:$0xff]
    %v399 = vld [vmem:[%s4 + $0x18] sm:$0xff]
    %v400 = vld [vmem:[%s5] sm:$0x1]
    %vm401 = vcmask 261120
    %v403 = vsel %vm401, %v388, 0
    %v406 = vsel %vm401, %v389, 0
    %v409 = vsel %vm401, %v390, 0
    %v412 = vsel %vm401, %v391, 0
    %v415 = vsel %vm401, %v392, 0
    %v418 = vsel %vm401, %v393, 0
    %v421 = vsel %vm401, %v394, 0
    %v424 = vsel %vm401, %v395, 0
    %426 = vmatprep.subr.mxu0 0.0
    %427 = vmatpush1.msra.mxu0 %v396
    %428 = vmatprep.subr.mxu0 0.0
    %429 = vmatpush1.msra.mxu0 %v397
    %430 = vmatprep.subr.mxu0 0.0
    %431 = vmatpush1.msra.mxu0 %v398
    %432 = vmatprep.subr.mxu0 0.0
    %433 = vmatpush1.msra.mxu0 %v399
    %434 = vmatprep.subr.mxu0 0.0
    %435 = vmatpush1.msra.mxu0 0.0
    %436 = vmatprep.subr.mxu0 0.0
    %437 = vmatpush1.msra.mxu0 0.0
    %438 = vmatprep.subr.mxu0 0.0
    %439 = vmatpush1.msra.mxu0 0.0
    %440 = vmatprep.subr.mxu0 0.0
    %441 = vmatpush1.msra.mxu0 0.0
    %442 = vmatprep.subr.mxu0 0.0
    %443 = vmatpush1.msra.mxu0 0.0
    %444 = vmatprep.subr.mxu0 0.0
    %445 = vmatpush1.msra.mxu0 0.0
    %446 = vmatprep.subr.mxu0 0.0
    %447 = vmatpush1.msra.mxu0 0.0
    %448 = vmatprep.subr.mxu0 0.0
    %449 = vmatpush1.msra.mxu0 0.0
    %450 = vmatprep.subr.mxu0 0.0
    %451 = vmatpush1.msra.mxu0 0.0
    %452 = vmatprep.subr.mxu0 0.0
    %453 = vmatpush1.msra.mxu0 0.0
    %454 = vmatprep.subr.mxu0 0.0
    %455 = vmatpush1.msra.mxu0 0.0
    %456 = vmatprep.subr.mxu0 0.0
    %457 = vmatpush1.msra.mxu0 0.0
    %458 = vmatprep.subr.mxu0 0.0
    %459 = vmatpush1.msra.mxu0 0.0
    %460 = vmatprep.subr.mxu0 0.0
    %461 = vmatpush1.msra.mxu0 0.0
    %462 = vmatprep.subr.mxu0 0.0
    %463 = vmatpush1.msra.mxu0 0.0
    %464 = vmatprep.subr.mxu0 0.0
    %465 = vmatpush1.msra.mxu0 0.0
    %466 = vmatprep.subr.mxu0 0.0
    %467 = vmatpush1.msra.mxu0 0.0
    %468 = vmatprep.subr.mxu0 0.0
    %469 = vmatpush1.msra.mxu0 0.0
    %470 = vmatprep.subr.mxu0 0.0
    %471 = vmatpush1.msra.mxu0 0.0
    %472 = vmatprep.subr.mxu0 0.0
    %473 = vmatpush1.msra.mxu0 0.0
    %474 = vmatprep.subr.mxu0 0.0
    %475 = vmatpush1.msra.mxu0 0.0
    %476 = vmatprep.subr.mxu0 0.0
    %477 = vmatpush1.msra.mxu0 0.0
    %478 = vmatprep.subr.mxu0 0.0
    %479 = vmatpush1.msra.mxu0 0.0
    %480 = vmatprep.subr.mxu0 0.0
    %481 = vmatpush1.msra.mxu0 0.0
    %482 = vmatprep.subr.mxu0 0.0
    %483 = vmatpush1.msra.mxu0 0.0
    %484 = vmatprep.subr.mxu0 0.0
    %485 = vmatpush1.msra.mxu0 0.0
    %486 = vmatprep.subr.mxu0 0.0
    %487 = vmatpush1.msra.mxu0 0.0
    %488 = vmatprep.subr.mxu0 0.0
    %489 = vmatpush1.msra.mxu0 0.0
    %490 = vmatprep.mubr.f32.mxu0 0.0
    %491 = vmatmul.mubr.f32.gmra.mrb[0].mxu0 %v403
    %v492 = vpop.f32.mrb[0].mxu0
    %v493 = vadd.f32 0.0, %v492
    %v494 = vpop.f32.mrb[0].mxu0
    %495 = vmatprep.mubr.f32.mxu0 0.0
    %496 = vmatmul.mubr.f32.gmra.mrb[0].mxu0 %v406
    %v497 = vpop.f32.mrb[0].mxu0
    %v498 = vadd.f32 0.0, %v497
    %v499 = vpop.f32.mrb[0].mxu0
    %500 = vmatprep.mubr.f32.mxu0 0.0
    %501 = vmatmul.mubr.f32.gmra.mrb[0].mxu0 %v409
    %v502 = vpop.f32.mrb[0].mxu0
    %v503 = vadd.f32 0.0, %v502
    %v504 = vpop.f32.mrb[0].mxu0
    %505 = vmatprep.mubr.f32.mxu0 0.0
    %506 = vmatmul.mubr.f32.gmra.mrb[0].mxu0 %v412
    %v507 = vpop.f32.mrb[0].mxu0
    %v508 = vadd.f32 0.0, %v507
    %v509 = vpop.f32.mrb[0].mxu0
    %510 = vmatprep.mubr.f32.mxu0 0.0
    %511 = vmatmul.mubr.f32.gmra.mrb[0].mxu0 %v415
    %v512 = vpop.f32.mrb[0].mxu0
    %v513 = vadd.f32 0.0, %v512
    %v514 = vpop.f32.mrb[0].mxu0
    %515 = vmatprep.mubr.f32.mxu0 0.0
    %516 = vmatmul.mubr.f32.gmra.mrb[0].mxu0 %v418
    %v517 = vpop.f32.mrb[0].mxu0
    %v518 = vadd.f32 0.0, %v517
    %v519 = vpop.f32.mrb[0].mxu0
    %520 = vmatprep.mubr.f32.mxu0 0.0
    %521 = vmatmul.mubr.f32.gmra.mrb[0].mxu0 %v421
    %v522 = vpop.f32.mrb[0].mxu0
    %v523 = vadd.f32 0.0, %v522
    %v524 = vpop.f32.mrb[0].mxu0
    %525 = vmatprep.mubr.f32.mxu0 0.0
    %526 = vmatmul.mubr.f32.gmra.mrb[0].mxu0 %v424
    %v527 = vpop.f32.mrb[0].mxu0
    %v528 = vadd.f32 0.0, %v527
    %v529 = vpop.f32.mrb[0].mxu0
    %530 = vdwg.mxu0
    %v532 = vlaneseq
    %v533 = vshrl.u32 %v532, 7
    %v534 = vsub.s32 0, %v533
    %v535 = vrot.slane %v400, %v534
    %537 = vmatprep.subr.mxu0 0.0
    %538 = vmatpush1.msra.mxu0 %v493
    %539 = vmatprep.subr.mxu0 0.0
    %540 = vmatpush1.msra.mxu0 %v498
    %541 = vmatprep.subr.mxu0 0.0
    %542 = vmatpush1.msra.mxu0 %v503
    %543 = vmatprep.subr.mxu0 0.0
    %544 = vmatpush1.msra.mxu0 %v508
    %545 = vmatprep.subr.mxu0 0.0
    %546 = vmatpush1.msra.mxu0 %v513
    %547 = vmatprep.subr.mxu0 0.0
    %548 = vmatpush1.msra.mxu0 %v518
    %549 = vmatprep.subr.mxu0 0.0
    %550 = vmatpush1.msra.mxu0 %v523
    %551 = vmatprep.subr.mxu0 0.0
    %552 = vmatpush1.msra.mxu0 %v528
    %553 = vmatprep.subr.mxu0 0.0
    %554 = vmatpush1.msra.mxu0 0.0
    %555 = vmatprep.subr.mxu0 0.0
    %556 = vmatpush1.msra.mxu0 0.0
    %557 = vmatprep.subr.mxu0 0.0
    %558 = vmatpush1.msra.mxu0 0.0
    %559 = vmatprep.subr.mxu0 0.0
    %560 = vmatpush1.msra.mxu0 0.0
    %561 = vmatprep.subr.mxu0 0.0
    %562 = vmatpush1.msra.mxu0 0.0
    %563 = vmatprep.subr.mxu0 0.0
    %564 = vmatpush1.msra.mxu0 0.0
    %565 = vmatprep.subr.mxu0 0.0
    %566 = vmatpush1.msra.mxu0 0.0
    %567 = vmatprep.subr.mxu0 0.0
    %568 = vmatpush1.msra.mxu0 0.0
    %569 = vmatprep.subr.mxu0 0.0
    %570 = vmatpush1.msra.mxu0 0.0
    %571 = vmatprep.subr.mxu0 0.0
    %572 = vmatpush1.msra.mxu0 0.0
    %573 = vmatprep.subr.mxu0 0.0
    %574 = vmatpush1.msra.mxu0 0.0
    %575 = vmatprep.subr.mxu0 0.0
    %576 = vmatpush1.msra.mxu0 0.0
    %577 = vmatprep.subr.mxu0 0.0
    %578 = vmatpush1.msra.mxu0 0.0
    %579 = vmatprep.subr.mxu0 0.0
    %580 = vmatpush1.msra.mxu0 0.0
    %581 = vmatprep.subr.mxu0 0.0
    %582 = vmatpush1.msra.mxu0 0.0
    %583 = vmatprep.subr.mxu0 0.0
    %584 = vmatpush1.msra.mxu0 0.0
    %585 = vmatprep.subr.mxu0 0.0
    %586 = vmatpush1.msra.mxu0 0.0
    %587 = vmatprep.subr.mxu0 0.0
    %588 = vmatpush1.msra.mxu0 0.0
    %589 = vmatprep.subr.mxu0 0.0
    %590 = vmatpush1.msra.mxu0 0.0
    %591 = vmatprep.subr.mxu0 0.0
    %592 = vmatpush1.msra.mxu0 0.0
    %593 = vmatprep.subr.mxu0 0.0
    %594 = vmatpush1.msra.mxu0 0.0
    %595 = vmatprep.subr.mxu0 0.0
    %596 = vmatpush1.msra.mxu0 0.0
    %597 = vmatprep.subr.mxu0 0.0
    %598 = vmatpush1.msra.mxu0 0.0
    %599 = vmatprep.subr.mxu0 0.0
    %600 = vmatpush1.msra.mxu0 0.0
    %601 = vmatprep.mubr.f32.mxu0 0.0
    %602 = vmatmul.mubr.f32.gmra.mrb[0].mxu0 %v124
    %v603 = vpop.f32.mrb[0].mxu0
    %v604 = vadd.f32 %v535, %v603
    %v605 = vpop.f32.mrb[0].mxu0
    %606 = vmatprep.mubr.f32.mxu0 0.0
    %607 = vmatmul.mubr.f32.gmra.mrb[0].mxu0 %v127
    %v608 = vpop.f32.mrb[0].mxu0
    %v609 = vadd.f32 %v535, %v608
    %v610 = vpop.f32.mrb[0].mxu0
    %611 = vmatprep.mubr.f32.mxu0 0.0
    %612 = vmatmul.mubr.f32.gmra.mrb[0].mxu0 %v130
    %v613 = vpop.f32.mrb[0].mxu0
    %v614 = vadd.f32 %v535, %v613
    %v615 = vpop.f32.mrb[0].mxu0
    %616 = vmatprep.mubr.f32.mxu0 0.0
    %617 = vmatmul.mubr.f32.gmra.mrb[0].mxu0 %v133
    %v618 = vpop.f32.mrb[0].mxu0
    %v619 = vadd.f32 %v535, %v618
    %v620 = vpop.f32.mrb[0].mxu0
    %621 = vmatprep.mubr.f32.mxu0 0.0
    %622 = vmatmul.mubr.f32.gmra.mrb[0].mxu0 %v136
    %v623 = vpop.f32.mrb[0].mxu0
    %v624 = vadd.f32 %v535, %v623
    %v625 = vpop.f32.mrb[0].mxu0
    %626 = vmatprep.mubr.f32.mxu0 0.0
    %627 = vmatmul.mubr.f32.gmra.mrb[0].mxu0 %v139
    %v628 = vpop.f32.mrb[0].mxu0
    %v629 = vadd.f32 %v535, %v628
    %v630 = vpop.f32.mrb[0].mxu0
    %631 = vmatprep.mubr.f32.mxu0 0.0
    %632 = vmatmul.mubr.f32.gmra.mrb[0].mxu0 %v142
    %v633 = vpop.f32.mrb[0].mxu0
    %v634 = vadd.f32 %v535, %v633
    %v635 = vpop.f32.mrb[0].mxu0
    %636 = vmatprep.mubr.f32.mxu0 0.0
    %637 = vmatmul.mubr.f32.gmra.mrb[0].mxu0 %v145
    %v638 = vpop.f32.mrb[0].mxu0
    %v639 = vadd.f32 %v535, %v638
    %v640 = vpop.f32.mrb[0].mxu0
    %641 = vdwg.mxu0
    %642 = vst [vmem:[#allocation2] sm:$0xff] %v604
    %643 = vst [vmem:[#allocation2 + $0x8] sm:$0xff] %v609
    %644 = vst [vmem:[#allocation2 + $0x10] sm:$0xff] %v614
    %645 = vst [vmem:[#allocation2 + $0x18] sm:$0xff] %v619
    %646 = vst [vmem:[#allocation2 + $0x20] sm:$0xff] %v624
    %647 = vst [vmem:[#allocation2 + $0x28] sm:$0xff] %v629
    %648 = vst [vmem:[#allocation2 + $0x30] sm:$0xff] %v634
    %649 = vst [vmem:[#allocation2 + $0x38] sm:$0xff] %v639
    // Predicated region
    $region26: #{tpu_custom_call.1} parent=1 // pred_check
      _
    $region27: #{tpu_custom_call.1} parent=1 // pred_check_branch
      %651 = sbr.rel (0) target = $region29
    $region28: #{tpu_custom_call.1} parent=1 // pred_region
      %s653 = ssub.s32 1024, 1024
      %654 = vsyncadd [#allocation3], %s653
      %s655 = sshll.u32 [#allocation2], 4
      %s656 = int_to_ptr.vmem [resolvable:$true] %s655
      %661 = dma.vmem_to_hbm [thread:$0]  %s656, 1024, %s6, [#allocation3], 128, 128, 8
    $region29: #{tpu_custom_call.1} parent=1 // pred_fallthru
      _
    // Predicated region
    $region30: #{tpu_custom_call.1} parent=1 // pred_check
      _
    $region31: #{tpu_custom_call.1} parent=1 // pred_check_branch
      %663 = sbr.rel (0) target = $region33
    $region32: #{tpu_custom_call.1} parent=1 // pred_region
      %664 = dma.done [#allocation3], 1024
    $region33: #{tpu_custom_call.1} parent=1 // pred_fallthru
      _
    %665 = vsyncpa [#allocation3], 1

</llo_original>
